<compile_context>
chip_gen: v7x
topology: tpu7x:2x2x1
jax: 0.10.0
libtpu: 0.0.40
codegen_flags: <defaults>
</compile_context>

<pallas_src>
import jax
import jax.numpy as jnp
from jax.experimental import pallas as pl
from jax.experimental.pallas import tpu as pltpu

D_IN = 128  # fixed by the module: nn.Linear(128, num_classes)


# ----------------------------------------------------------------------------
# Kernel: one (tm, 128) x-tile  @  one (128, tn) weight-tile  + bias, f32 acc.
# ----------------------------------------------------------------------------
def _linear_kernel(x_ref, w_ref, b_ref, o_ref):
    acc = jnp.dot(x_ref[...], w_ref[...], preferred_element_type=jnp.float32)
    o_ref[...] = (acc + b_ref[...]).astype(o_ref.dtype)


# ----------------------------------------------------------------------------
# One-time (init) parameter preparation: pad classes to a lane-dense multiple
# of 128 and pre-transpose the weight to (128, Np).  Do NOT call per forward.
# ----------------------------------------------------------------------------
def prepare_classifier_params(weight, bias, *, param_dtype=None):
    """weight: (num_classes, 128) PyTorch layout, bias: (num_classes,)."""
    N, D = weight.shape
    assert D == D_IN
    Np = max(128, pl.cdiv(N, 128) * 128)
    dt = param_dtype if param_dtype is not None else weight.dtype
    w_p = jnp.zeros((D, Np), dt).at[:, :N].set(weight.T.astype(dt))
    # Bias kept in f32 so the add happens on the f32 accumulator.
    b_p = jnp.zeros((1, Np), jnp.float32).at[0, :N].set(bias.astype(jnp.float32))
    return w_p, b_p


def _pick_tm(Bp, tm_max):
    """Largest multiple-of-8 divisor of Bp, capped so the grid has >=2 steps
    whenever Bp >= 16 (v7x dual-TC sharding / DMA overlap)."""
    cap = min(tm_max, Bp)
    if Bp >= 16:
        cap = min(cap, max(8, (Bp // 2) // 8 * 8))
    best, t = 8, 8
    while t <= cap:
        if Bp % t == 0:
            best = t
        t += 8
    return best


def _pick_tn(Np, tn_max):
    """Largest multiple-of-128 divisor of Np that is <= tn_max."""
    if Np <= tn_max:
        return Np
    best, t = 128, 128
    while t <= tn_max:
        if Np % t == 0:
            best = t
        t += 128
    return best


# ----------------------------------------------------------------------------
# Forward pass.  x: (B, 128); w_p: (128, Np); b_p: (1, Np)  (from prepare_*).
# ----------------------------------------------------------------------------
def classifier_forward(x, w_p, b_p, num_classes, *, tm_max=1024, tn_max=2048,
                       small_batch_threshold=0):
    B, D = x.shape
    Dw, Np = w_p.shape
    assert D == D_IN and Dw == D_IN and Np % 128 == 0

    # Tiny-batch fast path: a sub-microsecond 8x128xN matmul is pure
    # pallas_call overhead -- let XLA fuse it instead (opt-in via threshold).
    if small_batch_threshold and B < small_batch_threshold:
        out = jnp.dot(x, w_p[:, :num_classes],
                      preferred_element_type=jnp.float32) + b_p[0, :num_classes]
        return out.astype(x.dtype)

    # Batch: pad only to a multiple of 8 (no-op when already aligned).
    Bp = pl.cdiv(B, 8) * 8
    x_p = x if Bp == B else jnp.zeros((Bp, D), x.dtype).at[:B].set(x)

    tm = _pick_tm(Bp, tm_max)
    tn = _pick_tn(Np, tn_max)
    grid = (Bp // tm, Np // tn)

    xb = x.dtype.itemsize
    cost = pl.CostEstimate(
        flops=2 * Bp * D * Np,
        transcendentals=0,
        bytes_accessed=Bp * D * xb + D * Np * w_p.dtype.itemsize
                       + Np * 4 + Bp * Np * xb,
    )

    out_padded = pl.pallas_call(
        _linear_kernel,
        out_shape=jax.ShapeDtypeStruct((Bp, Np), x.dtype),
        grid=grid,
        in_specs=[
            pl.BlockSpec((tm, D), lambda i, j: (i, 0)),   # x tile streams over B
            pl.BlockSpec((D, tn), lambda i, j: (0, j)),   # pre-transposed weight tile
            pl.BlockSpec((1, tn), lambda i, j: (0, j)),   # bias tile (f32)
        ],
        out_specs=pl.BlockSpec((tm, tn), lambda i, j: (i, j)),
        compiler_params=pltpu.CompilerParams(
            dimension_semantics=("parallel", "parallel"),  # both axes shardable
        ),
        cost_estimate=cost,
    )(x_p, w_p, b_p)

    if Bp == B and Np == num_classes:
        return out_padded
    return out_padded[:B, :num_classes]


if __name__ == "__main__":
    key = jax.random.PRNGKey(0)
    k_x, k_w, k_b, k_x2 = jax.random.split(key, 4)

    num_classes = 10  # cfg.num_classes

    # Deterministic synthetic parameters (PyTorch-shaped: (out, in) / (out,))
    weight = jax.random.normal(k_w, (num_classes, D_IN), dtype=jnp.float32) * 0.05
    bias = jax.random.normal(k_b, (num_classes,), dtype=jnp.float32) * 0.05

    # One-time parameter prep (hoisted out of the forward path).
    w_p, b_p = prepare_classifier_params(weight, bias)

    # Case 1: small aligned batch, forced through the Pallas kernel.
    B = 8
    x = jax.random.normal(k_x, (B, D_IN), dtype=jnp.float32)
    out = jax.block_until_ready(
        classifier_forward(x, w_p, b_p, num_classes, small_batch_threshold=0))
    ref = x @ weight.T + bias
    assert out.shape == (B, num_classes)
    assert jnp.allclose(out, ref, atol=1e-5, rtol=1e-5)

    # Case 2: ragged batch (B % 8 != 0) -> exercises pad + multi-step grid.
    B2 = 20
    x2 = jax.random.normal(k_x2, (B2, D_IN), dtype=jnp.float32)
    out2 = jax.block_until_ready(
        classifier_forward(x2, w_p, b_p, num_classes, small_batch_threshold=0))
    ref2 = x2 @ weight.T + bias
    assert out2.shape == (B2, num_classes)
    assert jnp.allclose(out2, ref2, atol=1e-5, rtol=1e-5)

    # Case 3: default small-batch XLA fast path matches the kernel.
    out3 = jax.block_until_ready(
        classifier_forward(x, w_p, b_p, num_classes, small_batch_threshold=256))
    assert jnp.allclose(out3, ref, atol=1e-5, rtol=1e-5)

    print("KERNEL_OK")
</pallas_src>

<mosaic_0001>
module attributes {stable_mosaic.version = 11 : i64} {
  func.func @_linear_kernel(%arg0: i32, %arg1: i32, %arg2: memref<8x128xf32, #tpu.memory_space<vmem>>, %arg3: memref<128x128xf32, #tpu.memory_space<vmem>>, %arg4: memref<1x128xf32, #tpu.memory_space<vmem>>, %arg5: memref<8x128xf32, #tpu.memory_space<vmem>>) attributes {dimension_semantics = [#tpu.dimension_semantics<parallel>, #tpu.dimension_semantics<parallel>], iteration_bounds = array<i64: 1, 1>, scalar_prefetch = 0 : i64, scratch_operands = 0 : i64, tpu.core_type = #tpu.core_type<tc>, window_params = [{transform_indices = @transform_0, window_bounds = array<i64: 8, 128>}, {transform_indices = @transform_1, window_bounds = array<i64: 128, 128>}, {transform_indices = @transform_2, window_bounds = array<i64: 1, 128>}, {transform_indices = @transform_3, window_bounds = array<i64: 8, 128>}]} {
    %c0 = arith.constant 0 : index
    %c0_0 = arith.constant 0 : index
    %0 = vector.load %arg2[%c0, %c0_0] : memref<8x128xf32, #tpu.memory_space<vmem>>, vector<8x128xf32>
    %c0_1 = arith.constant 0 : index
    %c0_2 = arith.constant 0 : index
    %1 = vector.load %arg3[%c0_1, %c0_2] : memref<128x128xf32, #tpu.memory_space<vmem>>, vector<128x128xf32>
    %cst = arith.constant dense<0.000000e+00> : vector<8x128xf32>
    %2 = tpu.matmul %0, %1, %cst {dimension_numbers = #tpu.dot_dimension_numbers<[1], [0], [0], [1], [0, 0, 1, 1], [], []>} : vector<8x128xf32>, vector<128x128xf32>, vector<8x128xf32> -> vector<8x128xf32>
    %c0_3 = arith.constant 0 : index
    %c0_4 = arith.constant 0 : index
    %3 = vector.load %arg4[%c0_3, %c0_4] : memref<1x128xf32, #tpu.memory_space<vmem>>, vector<1x128xf32>
    %4 = vector.broadcast %3 : vector<1x128xf32> to vector<8x128xf32>
    %5 = arith.addf %2, %4 : vector<8x128xf32>
    %c0_5 = arith.constant 0 : index
    %c0_6 = arith.constant 0 : index
    %6 = vector.load %arg5[%c0_5, %c0_6] : memref<8x128xf32, #tpu.memory_space<vmem>>, vector<8x128xf32>
    tpu.vector_store %arg5[%c0_5, %c0_6], %5 {strides = array<i32>} : memref<8x128xf32, #tpu.memory_space<vmem>>, vector<8x128xf32>,
    return
  }
  func.func @transform_0(%arg0: i32, %arg1: i32) -> (i32, i32) {
    %c0_i32 = arith.constant 0 : i32
    %c0_i32_0 = arith.constant 0 : i32
    return %arg0, %c0_i32 : i32, i32
  }
  func.func @transform_1(%arg0: i32, %arg1: i32) -> (i32, i32) {
    %c0_i32 = arith.constant 0 : i32
    %c0_i32_0 = arith.constant 0 : i32
    return %c0_i32, %arg1 : i32, i32
  }
  func.func @transform_2(%arg0: i32, %arg1: i32) -> (i32, i32) {
    %c0_i32 = arith.constant 0 : i32
    %c0_i32_0 = arith.constant 0 : i32
    return %c0_i32, %arg1 : i32, i32
  }
  func.func @transform_3(%arg0: i32, %arg1: i32) -> (i32, i32) {
    %c0_i32 = arith.constant 0 : i32
    return %arg0, %arg1 : i32, i32
  }
}

</mosaic_0001>

<llo_original>
// kernel: tpu_custom_call.1
$region0: #{tpu_custom_call.1}
  #allocation0 [shape = 'u32[]', space=smem, size = 0x4, offset = 0x4, fixed_abs, tag = 'smem constant byte address 0x4 - core index']
  #allocation1 [shape = 'u32[144,128]{1,0:T(1,128)}', space=vmem, size = 0x12000, scoped, tag = 'internal scratch']
  %s0 = inlined_call_operand.hbm [shape: f32[8,128], index: 0, kind: input, shape index: {}]
  %s1 = inlined_call_operand.hbm [shape: f32[128,128], index: 1, kind: input, shape index: {}]
  %s2 = inlined_call_operand.vmem [shape: f32[1,128], index: 2, kind: input, shape index: {}]
  %s3 = inlined_call_operand.hbm [shape: f32[8,128], index: 3, kind: output, shape index: {}]
  %s4 = sld [smem:[#allocation0]]
  $region30: #{tpu_custom_call.1} parent=0
    _
  %s6 = ssub.s32 1, %s4
  %s7 = scalar_select 0, %s6, %s4
  $region1: #{tpu_custom_call.1} parent=0
    #allocation2 [shape = 'u8[4096]{0}', space=vmem, size = 0x1000, scoped, tag = 'input window, operand 0, single buffered']
    #allocation3 [shape = 's32[1]{0}', space=sflag, size = 0x4, scoped, tag = 'scoped memory for tpu_custom_call.1']
    #allocation4 [shape = 's32[1]{0}', space=sflag, size = 0x4, scoped, tag = 'scoped memory for tpu_custom_call.1']
    #allocation5 [shape = 'u8[65536]{0}', space=vmem, size = 0x10000, scoped, tag = 'input window, operand 1, single buffered']
    #allocation6 [shape = 's32[1]{0}', space=sflag, size = 0x4, scoped, tag = 'scoped memory for tpu_custom_call.1']
    #allocation7 [shape = 'u8[4096]{0}', space=vmem, size = 0x1000, scoped, tag = 'output window, operand 0, single buffered']
    %8 = vsyncpa [#allocation3], 0
    %9 = vsyncpa [#allocation6], 0
    %10 = vsyncpa [#allocation4], 0
    // Predicated region
    $region2: #{tpu_custom_call.1} parent=1 // pred_check
      _
    $region3: #{tpu_custom_call.1} parent=1 // pred_check_branch
      %12 = sbr.rel (0) target = $region5
    $region4: #{tpu_custom_call.1} parent=1 // pred_region
      %s14 = ssub.s32 128, 128
      %15 = vsyncadd [#allocation3], %s14
      %s17 = sshll.u32 [#allocation2], 4
      %s18 = int_to_ptr.vmem [resolvable:$true] %s17
      %20 = dma.hbm_to_vmem [thread:$0]  %s0, 128, %s18, [#allocation3]
    $region5: #{tpu_custom_call.1} parent=1 // pred_fallthru
      _
    // Predicated region
    $region6: #{tpu_custom_call.1} parent=1 // pred_check
      _
    $region7: #{tpu_custom_call.1} parent=1 // pred_check_branch
      %22 = sbr.rel (0) target = $region9
    $region8: #{tpu_custom_call.1} parent=1 // pred_region
      %s24 = ssub.s32 2048, 2048
      %25 = vsyncadd [#allocation6], %s24
      %s26 = sshll.u32 [#allocation5], 4
      %s27 = int_to_ptr.vmem [resolvable:$true] %s26
      %32 = dma.hbm_to_vmem [thread:$0]  %s1, 2048, %s27, [#allocation6], 128, 128, 8
    $region9: #{tpu_custom_call.1} parent=1 // pred_fallthru
      _
    // Predicated region
    $region10: #{tpu_custom_call.1} parent=1 // pred_check
      _
    $region11: #{tpu_custom_call.1} parent=1 // pred_check_branch
      %34 = sbr.rel (0) target = $region13
    $region12: #{tpu_custom_call.1} parent=1 // pred_region
      _
    $region13: #{tpu_custom_call.1} parent=1 // pred_fallthru
      _
    // Predicated region
    $region14: #{tpu_custom_call.1} parent=1 // pred_check
      _
    $region15: #{tpu_custom_call.1} parent=1 // pred_check_branch
      %36 = sbr.rel (0) target = $region17
    $region16: #{tpu_custom_call.1} parent=1 // pred_region
      %37 = dma.done [#allocation3], 128
    $region17: #{tpu_custom_call.1} parent=1 // pred_fallthru
      _
    // Predicated region
    $region18: #{tpu_custom_call.1} parent=1 // pred_check
      _
    $region19: #{tpu_custom_call.1} parent=1 // pred_check_branch
      %39 = sbr.rel (0) target = $region21
    $region20: #{tpu_custom_call.1} parent=1 // pred_region
      %40 = dma.done [#allocation6], 2048
    $region21: #{tpu_custom_call.1} parent=1 // pred_fallthru
      _
    %v41 = vld [vmem:[#allocation2] sm:$0xff]
    %v42 = vld [vmem:[#allocation5] sm:$0xff]
    %v43 = vld [vmem:[#allocation5 + $0x8] sm:$0xff]
    %v44 = vld [vmem:[#allocation5 + $0x10] sm:$0xff]
    %v45 = vld [vmem:[#allocation5 + $0x18] sm:$0xff]
    %v46 = vld [vmem:[#allocation5 + $0x20] sm:$0xff]
    %v47 = vld [vmem:[#allocation5 + $0x28] sm:$0xff]
    %v48 = vld [vmem:[#allocation5 + $0x30] sm:$0xff]
    %v49 = vld [vmem:[#allocation5 + $0x38] sm:$0xff]
    %v50 = vld [vmem:[#allocation5 + $0x40] sm:$0xff]
    %v51 = vld [vmem:[#allocation5 + $0x48] sm:$0xff]
    %v52 = vld [vmem:[#allocation5 + $0x50] sm:$0xff]
    %v53 = vld [vmem:[#allocation5 + $0x58] sm:$0xff]
    %v54 = vld [vmem:[#allocation5 + $0x60] sm:$0xff]
    %v55 = vld [vmem:[#allocation5 + $0x68] sm:$0xff]
    %v56 = vld [vmem:[#allocation5 + $0x70] sm:$0xff]
    %v57 = vld [vmem:[#allocation5 + $0x78] sm:$0xff]
    %v58 = vld [vmem:[%s2] sm:$0x1]
    %v60 = vlaneseq
    %v61 = vshrl.u32 %v60, 7
    %v62 = vsub.s32 0, %v61
    %v63 = vrot.slane %v58, %v62
    %65 = vmatprep.subr.mxu0 0.0
    %66 = vmatpush1.msra.mxu0 %v42
    %67 = vmatprep.subr.mxu0 0.0
    %68 = vmatpush1.msra.mxu0 %v43
    %69 = vmatprep.subr.mxu0 0.0
    %70 = vmatpush1.msra.mxu0 %v44
    %71 = vmatprep.subr.mxu0 0.0
    %72 = vmatpush1.msra.mxu0 %v45
    %73 = vmatprep.subr.mxu0 0.0
    %74 = vmatpush1.msra.mxu0 %v46
    %75 = vmatprep.subr.mxu0 0.0
    %76 = vmatpush1.msra.mxu0 %v47
    %77 = vmatprep.subr.mxu0 0.0
    %78 = vmatpush1.msra.mxu0 %v48
    %79 = vmatprep.subr.mxu0 0.0
    %80 = vmatpush1.msra.mxu0 %v49
    %81 = vmatprep.subr.mxu0 0.0
    %82 = vmatpush1.msra.mxu0 %v50
    %83 = vmatprep.subr.mxu0 0.0
    %84 = vmatpush1.msra.mxu0 %v51
    %85 = vmatprep.subr.mxu0 0.0
    %86 = vmatpush1.msra.mxu0 %v52
    %87 = vmatprep.subr.mxu0 0.0
    %88 = vmatpush1.msra.mxu0 %v53
    %89 = vmatprep.subr.mxu0 0.0
    %90 = vmatpush1.msra.mxu0 %v54
    %91 = vmatprep.subr.mxu0 0.0
    %92 = vmatpush1.msra.mxu0 %v55
    %93 = vmatprep.subr.mxu0 0.0
    %94 = vmatpush1.msra.mxu0 %v56
    %95 = vmatprep.subr.mxu0 0.0
    %96 = vmatpush1.msra.mxu0 %v57
    %97 = vmatprep.subr.mxu0 0.0
    %98 = vmatpush1.msra.mxu0 0.0
    %99 = vmatprep.subr.mxu0 0.0
    %100 = vmatpush1.msra.mxu0 0.0
    %101 = vmatprep.subr.mxu0 0.0
    %102 = vmatpush1.msra.mxu0 0.0
    %103 = vmatprep.subr.mxu0 0.0
    %104 = vmatpush1.msra.mxu0 0.0
    %105 = vmatprep.subr.mxu0 0.0
    %106 = vmatpush1.msra.mxu0 0.0
    %107 = vmatprep.subr.mxu0 0.0
    %108 = vmatpush1.msra.mxu0 0.0
    %109 = vmatprep.subr.mxu0 0.0
    %110 = vmatpush1.msra.mxu0 0.0
    %111 = vmatprep.subr.mxu0 0.0
    %112 = vmatpush1.msra.mxu0 0.0
    %113 = vmatprep.subr.mxu0 0.0
    %114 = vmatpush1.msra.mxu0 0.0
    %115 = vmatprep.subr.mxu0 0.0
    %116 = vmatpush1.msra.mxu0 0.0
    %117 = vmatprep.subr.mxu0 0.0
    %118 = vmatpush1.msra.mxu0 0.0
    %119 = vmatprep.subr.mxu0 0.0
    %120 = vmatpush1.msra.mxu0 0.0
    %121 = vmatprep.subr.mxu0 0.0
    %122 = vmatpush1.msra.mxu0 0.0
    %123 = vmatprep.subr.mxu0 0.0
    %124 = vmatpush1.msra.mxu0 0.0
    %125 = vmatprep.subr.mxu0 0.0
    %126 = vmatpush1.msra.mxu0 0.0
    %127 = vmatprep.subr.mxu0 0.0
    %128 = vmatpush1.msra.mxu0 0.0
    %129 = vmatprep.mubr.f32.mxu0 0.0
    %130 = vmatmul.mubr.f32.gmra.mrb[0].mxu0 %v41
    %v131 = vpop.f32.mrb[0].mxu0
    %v132 = vadd.f32 %v63, %v131
    %v133 = vpop.f32.mrb[0].mxu0
    %134 = vdwg.mxu0
    %135 = vst [vmem:[#allocation7] sm:$0xff] %v132
    // Predicated region
    $region22: #{tpu_custom_call.1} parent=1 // pred_check
      _
    $region23: #{tpu_custom_call.1} parent=1 // pred_check_branch
      %137 = sbr.rel (0) target = $region25
    $region24: #{tpu_custom_call.1} parent=1 // pred_region
      %s139 = ssub.s32 128, 128
      %140 = vsyncadd [#allocation4], %s139
      %s142 = sshll.u32 [#allocation7], 4
      %s143 = int_to_ptr.vmem [resolvable:$true] %s142
      %145 = dma.vmem_to_hbm [thread:$0]  %s143, 128, %s3, [#allocation4]
    $region25: #{tpu_custom_call.1} parent=1 // pred_fallthru
      _
    // Predicated region
    $region26: #{tpu_custom_call.1} parent=1 // pred_check
      _
    $region27: #{tpu_custom_call.1} parent=1 // pred_check_branch
      %147 = sbr.rel (0) target = $region29
    $region28: #{tpu_custom_call.1} parent=1 // pred_region
      %148 = dma.done [#allocation4], 128
    $region29: #{tpu_custom_call.1} parent=1 // pred_fallthru
      _
    %149 = vsyncpa [#allocation3], 1
    %150 = vsyncpa [#allocation6], 1
    %151 = vsyncpa [#allocation4], 1

</llo_original>
